<compile_context>
chip_gen: v6e
topology: v6e:2x2x1
jax: 0.10.0
libtpu: 0.0.40
codegen_flags: <defaults>
</compile_context>

<pallas_src>
import math
from functools import partial

import jax
import jax.numpy as jnp
from jax.experimental import pallas as pl
from jax.experimental.pallas import tpu as pltpu


def _round_up(a, b):
    return (a + b - 1) // b * b


def _vmem_budget_and_cores():
    """Generation-aware usable-VMEM budget (bytes) and TensorCore count."""
    capacity = 64 << 20          # conservative default (v7x has the smallest VMEM)
    cores = 1
    try:
        info = pltpu.get_tpu_info()
        cap = getattr(info, "vmem_capacity_bytes", None)
        if cap:
            capacity = int(cap)
        for attr in ("num_cores", "core_count", "num_tensorcores",
                     "tensorcore_count", "cores_per_chip"):
            val = getattr(info, attr, None)
            if val is None:
                continue
            try:
                val = int(val)
            except Exception:
                continue
            if val > 0:
                cores = max(1, min(val, 2))
                break
    except Exception:            # interpret mode / unexpected backends
        pass
    # Leave ~16 MiB for compiler-internal scratch: ~48 MiB on v7x, ~112 MiB on v5e/v6e.
    budget = max(32 << 20, min(capacity - (16 << 20), 112 << 20))
    return budget, cores


def _band_bytes(C_in, C_out, ts, P, itemsize):
    half = _round_up(C_out * ts, 128)
    return 2 * _round_up(C_in * (ts + P), 8) * (2 * half) * itemsize   # double-buffered


def _choose_ts(S_out, C_in, C_out, P, itemsize, budget, target):
    """Time-tile length: single tile for short sequences, else a multiple of 128
    (>= P so the halo fits one carry buffer) small enough that the double-buffered
    band stays within ~1/3 of the VMEM budget."""
    if S_out <= max(target, 128):
        return S_out
    ts = _round_up(max(min(target, S_out), P, 128), 128)
    floor = _round_up(max(P, 128), 128)
    while ts > floor and _band_bytes(C_in, C_out, ts, P, itemsize) > budget // 3:
        ts -= 128
    return max(ts, floor)


def _choose_tm(M, C_in, TS, P, half_pad, win, in_isz, out_isz, budget, cores):
    """Rows per tile: largest multiple of 8 whose blocks (all double-buffered, incl.
    the grid-invariant band/bias) fit `budget`.  Only split the row axis when the part
    actually has >1 TensorCore to shard the 'parallel' axis over."""
    fixed = (2 * _round_up(C_in * win, 8) * (2 * half_pad) * in_isz        # band x2 bufs
             + 2 * 8 * (2 * half_pad) * 4)                                 # f32 bias x2
    per_row = (2 * _round_up(C_in, 8) * _round_up(TS, 128) * in_isz        # x block x2
               + 2 * half_pad * out_isz                                    # out block x2
               + _round_up(C_in, 8) * _round_up(max(P, 1), 128) * in_isz)  # carry scratch
    avail = budget - fixed - (2 << 20)
    if avail < 8 * per_row:
        tm = 8
    else:
        tm = min((avail // per_row) // 8 * 8, 1024)
    tm = min(tm, _round_up(M, 8))
    if cores >= 2 and M > 8:
        tm = min(tm, max(8, _round_up(-(-M // cores), 8)))
    return max(tm, 8)


def _build_band_and_bias(weight, bias, C_in, C_out, K, d, TS, P, win, half_pad,
                         compute_dtype):
    """Shift-invariant banded weight matrix (scatter build, no O(S^2) onehot/einsum).

    Rows (contraction axis), grouped per input channel ci (win = TS + P rows each):
        row = ci*win + v,   v in [0, P)     -> halo position v  (carry / causal pad)
                            v in [P, P+TS)  -> body position v-P of the time tile
    Columns (output axis), 128-aligned halves [tanh | sigmoid], channel-major:
        col = half*half_pad + co*TS + u     (u = local output time, time innermost)
    Value for output u, tap k: weight[half*C_out + co, ci, 0, k]  placed at v = u + k*d.
    """
    w = weight[:, :, 0, :].astype(jnp.float32)                    # (2*C_out, C_in, K)
    u = jnp.arange(TS)
    k = jnp.arange(K)
    ci = jnp.arange(C_in)
    oc = jnp.arange(2 * C_out)
    rows = (ci[:, None, None, None] * win
            + u[None, :, None, None] + k[None, None, :, None] * d)        # (C_in,TS,K,1)
    cols = (((oc // C_out) * half_pad + (oc % C_out) * TS)[None, None, None, :]
            + u[None, :, None, None])                                     # (1,TS,1,2C)
    vals = jnp.transpose(w, (1, 2, 0))[:, None, :, :]                     # (C_in,1,K,2C)
    shape = (C_in, TS, K, 2 * C_out)
    band = jnp.zeros((C_in * win, 2 * half_pad), jnp.float32)
    band = band.at[jnp.broadcast_to(rows, shape).ravel(),
                   jnp.broadcast_to(cols, shape).ravel()].set(
        jnp.broadcast_to(vals, shape).ravel())
    band = band.astype(compute_dtype)

    b2 = bias.astype(jnp.float32).reshape(2, C_out, 1)
    b_half = jnp.broadcast_to(b2, (2, C_out, TS)).reshape(2, C_out * TS)
    b_half = jnp.pad(b_half, ((0, 0), (0, half_pad - C_out * TS)))
    b_exp = b_half.reshape(1, 2 * half_pad)                               # stays f32
    return band, b_exp


def _gated_band_kernel(x_ref, w_ref, b_ref, o_ref, *carry,
                       c_in, ts, halo, half_pad, win, use_carry):
    """x_ref: (TM, C_in, TS)   w_ref: (C_in*win, 2*half_pad)   b_ref: (1, 2*half_pad)
    o_ref: (TM, half_pad)      carry (optional scratch): (TM, C_in, halo)."""
    if use_carry:
        carry_ref = carry[0]

        @pl.when(pl.program_id(1) == 0)
        def _zero_halo():            # causal left pad: the first time tile sees zeros
            carry_ref[...] = jnp.zeros_like(carry_ref)

    acc = None
    for ci in range(c_in):
        part = jnp.dot(x_ref[:, ci, :],
                       w_ref[pl.ds(ci * win + halo, ts), :],
                       preferred_element_type=jnp.float32)
        if use_carry:
            part = part + jnp.dot(carry[0][:, ci, :],
                                  w_ref[pl.ds(ci * win, halo), :],
                                  preferred_element_type=jnp.float32)
        acc = part if acc is None else acc + part

    if use_carry:
        carry[0][...] = x_ref[:, :, ts - halo:]     # halo for the next time tile

    acc = acc + b_ref[...]
    o_ref[...] = (jnp.tanh(acc[:, :half_pad]) *
                  jax.nn.sigmoid(acc[:, half_pad:])).astype(o_ref.dtype)


def gated_temporal_conv(x, weight, bias, *, kernel_size, dilation=1, stride=1,
                        causal_pad=True, compute_dtype=jnp.float32, time_tile=256):
    """Forward of GatedTemporalConv.

    x: (B, C_in, N, S) NCHW.  weight: (2*C_out, C_in, 1, K) torch Conv2d layout.
    bias: (2*C_out,).  Returns (B, C_out, N, S).
    compute_dtype: dtype fed to the MXU (jnp.bfloat16 halves HBM/VMEM traffic; the
    accumulation and gating stay float32).
    """
    assert stride == 1, "only stride=1 implemented"
    assert causal_pad, "only causal padding implemented"
    # TODO(synk): non-causal ZeroPad2d(int) padding (pads the node axis too), stride>1,
    #             channel_last=True and weight_norm reparametrisation not ported.

    B, C_in, N, S = x.shape
    C_out = weight.shape[0] // 2
    K, d = kernel_size, dilation
    P = (K - 1) * d              # causal halo length
    S_out = S                    # stride=1, causal

    budget, cores = _vmem_budget_and_cores()
    in_isz = jnp.dtype(compute_dtype).itemsize
    out_dtype = x.dtype
    out_isz = jnp.dtype(out_dtype).itemsize

    TS = _choose_ts(S_out, C_in, C_out, P, in_isz, budget, target=time_tile)
    n_tt = -(-S_out // TS)
    win = TS + P
    half_pad = _round_up(C_out * TS, 128)
    use_carry = (n_tt > 1) and (P > 0)

    band, b_exp = _build_band_and_bias(weight, bias, C_in, C_out, K, d, TS, P, win,
                                       half_pad, compute_dtype)

    M = B * N
    TM = _choose_tm(M, C_in, TS, P, half_pad, win, in_isz, out_isz, budget, cores)
    Mp = _round_up(M, TM)
    S_in = n_tt * TS

    # NCHW -> (B*N) rows, channel-major (C_in, S) per row.  Both transposes keep S
    # innermost (cheap) and fuse with the right/row pad into one relayout pass.
    xt = jnp.transpose(x, (0, 2, 1, 3)).reshape(M, C_in, S)
    xt = jnp.pad(xt, ((0, Mp - M), (0, 0), (0, S_in - S)))
    xf = xt.astype(compute_dtype)

    grid = (Mp // TM, n_tt)
    out_cols = n_tt * half_pad
    cost = pl.CostEstimate(
        flops=2 * Mp * n_tt * (C_in * win) * (2 * half_pad),
        transcendentals=3 * Mp * out_cols,
        bytes_accessed=(xf.size * in_isz + band.size * in_isz + b_exp.size * 4
                        + Mp * out_cols * out_isz))

    scratch = []
    if use_carry:
        scratch.append(pltpu.VMEM((TM, C_in, P), compute_dtype))

    yf = pl.pallas_call(
        partial(_gated_band_kernel, c_in=C_in, ts=TS, halo=P,
                half_pad=half_pad, win=win, use_carry=use_carry),
        out_shape=jax.ShapeDtypeStruct((Mp, out_cols), out_dtype),
        grid_spec=pltpu.PrefetchScalarGridSpec(
            num_scalar_prefetch=0,
            grid=grid,
            in_specs=[
                pl.BlockSpec((TM, C_in, TS), lambda i, j: (i, 0, j)),
                pl.BlockSpec((C_in * win, 2 * half_pad), lambda i, j: (0, 0)),
                pl.BlockSpec((1, 2 * half_pad), lambda i, j: (0, 0)),
            ],
            out_specs=pl.BlockSpec((TM, half_pad), lambda i, j: (i, j)),
            scratch_shapes=scratch,
        ),
        compiler_params=pltpu.CompilerParams(
            dimension_semantics=("parallel", "arbitrary"),
            vmem_limit_bytes=budget,
        ),
        cost_estimate=cost,
    )(xf, band, b_exp)

    # (Mp, n_tt*half_pad) -> (B, C_out, N, S); every transpose keeps time innermost.
    y = yf[:M].reshape(M, n_tt, half_pad)[:, :, :C_out * TS]
    y = y.reshape(M, n_tt, C_out, TS)
    y = jnp.transpose(y, (0, 2, 1, 3)).reshape(M, C_out, n_tt * TS)[:, :, :S_out]
    y = y.reshape(B, N, C_out, S_out)
    return jnp.transpose(y, (0, 2, 1, 3))


def _reference(x, weight, bias, *, kernel_size, dilation=1):
    """Pure-JAX reference mirroring the PyTorch forward (causal pad + Conv2d + gated tanh)."""
    K = kernel_size
    P = (K - 1) * dilation
    C_out = weight.shape[0] // 2
    x_pad = jnp.pad(x, ((0, 0), (0, 0), (0, 0), (P, 0)))
    y = jax.lax.conv_general_dilated(
        x_pad, weight, window_strides=(1, 1), padding="VALID",
        rhs_dilation=(1, dilation),
        dimension_numbers=("NCHW", "OIHW", "NCHW"))
    y = y + bias.reshape(1, -1, 1, 1)
    return jnp.tanh(y[:, :C_out]) * jax.nn.sigmoid(y[:, C_out:])


if __name__ == "__main__":
    key = jax.random.PRNGKey(0)
    kx, kw, kb, kx2 = jax.random.split(key, 4)

    fwd = jax.jit(gated_temporal_conv,
                  static_argnames=("kernel_size", "dilation", "stride", "causal_pad",
                                   "compute_dtype", "time_tile"))

    # GatedTemporalConv(input_channels=4, output_channels=8, kernel_size=3)
    C_in, C_out, K = 4, 8, 3
    bound = 1.0 / math.sqrt(C_in * K)
    weight = jax.random.uniform(kw, (2 * C_out, C_in, 1, K), jnp.float32, -bound, bound)
    bias = jax.random.uniform(kb, (2 * C_out,), jnp.float32, -bound, bound)

    # 1) toy NCHW shape, f32, dilation 1 and 2 (single time-tile path)
    B, N, S = 2, 16, 16
    x = jax.random.normal(kx, (B, C_in, N, S), dtype=jnp.float32)
    for dil in (1, 2):
        y = jax.block_until_ready(fwd(x, weight, bias, kernel_size=K, dilation=dil))
        y_ref = _reference(x, weight, bias, kernel_size=K, dilation=dil)
        assert y.shape == (B, C_out, N, S), y.shape
        err = float(jnp.max(jnp.abs(y - y_ref)))
        assert jnp.allclose(y, y_ref, atol=3e-5, rtol=3e-5), ("f32", dil, err)

    # 2) bfloat16 compute path (same shapes, looser tolerance)
    y = jax.block_until_ready(fwd(x, weight, bias, kernel_size=K, dilation=1,
                                  compute_dtype=jnp.bfloat16))
    y_ref = _reference(x, weight, bias, kernel_size=K, dilation=1)
    err = float(jnp.max(jnp.abs(y - y_ref)))
    assert jnp.allclose(y, y_ref, atol=5e-2), ("bf16", err)

    # 3) longer sequence -> multiple time tiles exercising the carry/halo buffer
    B2, N2, S2 = 1, 4, 320
    x2 = jax.random.normal(kx2, (B2, C_in, N2, S2), dtype=jnp.float32)
    y = jax.block_until_ready(fwd(x2, weight, bias, kernel_size=K, dilation=2))
    y_ref = _reference(x2, weight, bias, kernel_size=K, dilation=2)
    assert y.shape == (B2, C_out, N2, S2), y.shape
    err = float(jnp.max(jnp.abs(y - y_ref)))
    assert jnp.allclose(y, y_ref, atol=3e-5, rtol=3e-5), ("long", err)

    print("KERNEL_OK")
</pallas_src>

<mosaic_0001>
module attributes {stable_mosaic.version = 11 : i64} {
  func.func @_gated_band_kernel(%arg0: i32, %arg1: i32, %arg2: memref<32x4x16xf32, #tpu.memory_space<vmem>>, %arg3: memref<72x256xf32, #tpu.memory_space<vmem>>, %arg4: memref<1x256xf32, #tpu.memory_space<vmem>>, %arg5: memref<32x128xf32, #tpu.memory_space<vmem>>) attributes {dimension_semantics = [#tpu.dimension_semantics<parallel>, #tpu.dimension_semantics<arbitrary>], iteration_bounds = array<i64: 1, 1>, scalar_prefetch = 0 : i64, scratch_operands = 0 : i64, tpu.core_type = #tpu.core_type<tc>, window_params = [{transform_indices = @transform_0, window_bounds = array<i64: 32, 4, 16>}, {pipeline_mode = #tpu.pipeline_mode<synchronous>, transform_indices = @transform_1, window_bounds = array<i64: 72, 256>}, {pipeline_mode = #tpu.pipeline_mode<synchronous>, transform_indices = @transform_2, window_bounds = array<i64: 1, 256>}, {transform_indices = @transform_3, window_bounds = array<i64: 32, 128>}]} {
    %c0 = arith.constant 0 : index
    %c0_0 = arith.constant 0 : index
    %c0_1 = arith.constant 0 : index
    %0 = vector.load %arg2[%c0, %c0_0, %c0_1] : memref<32x4x16xf32, #tpu.memory_space<vmem>>, vector<32x1x16xf32>
    %1 = vector.shape_cast %0 : vector<32x1x16xf32> to vector<32x16xf32>
    %c2 = arith.constant 2 : index
    %c0_2 = arith.constant 0 : index
    %2 = vector.load %arg3[%c2, %c0_2] : memref<72x256xf32, #tpu.memory_space<vmem>>, vector<16x256xf32>
    %cst = arith.constant dense<0.000000e+00> : vector<32x256xf32>
    %3 = tpu.matmul %1, %2, %cst {dimension_numbers = #tpu.dot_dimension_numbers<[1], [0], [0], [1], [0, 0, 1, 1], [], []>} : vector<32x16xf32>, vector<16x256xf32>, vector<32x256xf32> -> vector<32x256xf32>
    %c0_3 = arith.constant 0 : index
    %c1 = arith.constant 1 : index
    %c0_4 = arith.constant 0 : index
    %4 = vector.load %arg2[%c0_3, %c1, %c0_4] : memref<32x4x16xf32, #tpu.memory_space<vmem>>, vector<32x1x16xf32>
    %5 = vector.shape_cast %4 : vector<32x1x16xf32> to vector<32x16xf32>
    %c20 = arith.constant 20 : index
    %c0_5 = arith.constant 0 : index
    %6 = vector.load %arg3[%c20, %c0_5] : memref<72x256xf32, #tpu.memory_space<vmem>>, vector<16x256xf32>
    %cst_6 = arith.constant dense<0.000000e+00> : vector<32x256xf32>
    %7 = tpu.matmul %5, %6, %cst_6 {dimension_numbers = #tpu.dot_dimension_numbers<[1], [0], [0], [1], [0, 0, 1, 1], [], []>} : vector<32x16xf32>, vector<16x256xf32>, vector<32x256xf32> -> vector<32x256xf32>
    %8 = arith.addf %3, %7 : vector<32x256xf32>
    %c0_7 = arith.constant 0 : index
    %c2_8 = arith.constant 2 : index
    %c0_9 = arith.constant 0 : index
    %9 = vector.load %arg2[%c0_7, %c2_8, %c0_9] : memref<32x4x16xf32, #tpu.memory_space<vmem>>, vector<32x1x16xf32>
    %10 = vector.shape_cast %9 : vector<32x1x16xf32> to vector<32x16xf32>
    %c38 = arith.constant 38 : index
    %c0_10 = arith.constant 0 : index
    %11 = vector.load %arg3[%c38, %c0_10] : memref<72x256xf32, #tpu.memory_space<vmem>>, vector<16x256xf32>
    %cst_11 = arith.constant dense<0.000000e+00> : vector<32x256xf32>
    %12 = tpu.matmul %10, %11, %cst_11 {dimension_numbers = #tpu.dot_dimension_numbers<[1], [0], [0], [1], [0, 0, 1, 1], [], []>} : vector<32x16xf32>, vector<16x256xf32>, vector<32x256xf32> -> vector<32x256xf32>
    %13 = arith.addf %8, %12 : vector<32x256xf32>
    %c0_12 = arith.constant 0 : index
    %c3 = arith.constant 3 : index
    %c0_13 = arith.constant 0 : index
    %14 = vector.load %arg2[%c0_12, %c3, %c0_13] : memref<32x4x16xf32, #tpu.memory_space<vmem>>, vector<32x1x16xf32>
    %15 = vector.shape_cast %14 : vector<32x1x16xf32> to vector<32x16xf32>
    %c56 = arith.constant 56 : index
    %c0_14 = arith.constant 0 : index
    %16 = vector.load %arg3[%c56, %c0_14] : memref<72x256xf32, #tpu.memory_space<vmem>>, vector<16x256xf32>
    %cst_15 = arith.constant dense<0.000000e+00> : vector<32x256xf32>
    %17 = tpu.matmul %15, %16, %cst_15 {dimension_numbers = #tpu.dot_dimension_numbers<[1], [0], [0], [1], [0, 0, 1, 1], [], []>} : vector<32x16xf32>, vector<16x256xf32>, vector<32x256xf32> -> vector<32x256xf32>
    %18 = arith.addf %13, %17 : vector<32x256xf32>
    %c0_16 = arith.constant 0 : index
    %c0_17 = arith.constant 0 : index
    %19 = vector.load %arg4[%c0_16, %c0_17] : memref<1x256xf32, #tpu.memory_space<vmem>>, vector<1x256xf32>
    %20 = vector.broadcast %19 : vector<1x256xf32> to vector<32x256xf32>
    %21 = arith.addf %18, %20 : vector<32x256xf32>
    %22 = vector.extract_strided_slice %21 {offsets = [0, 0], sizes = [32, 128], strides = [1, 1]} : vector<32x256xf32> to vector<32x128xf32>
    %23 = math.tanh %22 : vector<32x128xf32>
    %24 = vector.extract_strided_slice %21 {offsets = [0, 128], sizes = [32, 128], strides = [1, 1]} : vector<32x256xf32> to vector<32x128xf32>
    %25 = arith.negf %24 : vector<32x128xf32>
    %26 = math.exp %25 : vector<32x128xf32>
    %cst_18 = arith.constant 1.000000e+00 : f32
    %27 = vector.broadcast %cst_18 : f32 to vector<32x128xf32>
    %28 = arith.addf %27, %26 : vector<32x128xf32>
    %29 = arith.divf %27, %28 : vector<32x128xf32>
    %30 = arith.mulf %23, %29 : vector<32x128xf32>
    %c0_19 = arith.constant 0 : index
    %c0_20 = arith.constant 0 : index
    %31 = vector.load %arg5[%c0_19, %c0_20] : memref<32x128xf32, #tpu.memory_space<vmem>>, vector<32x128xf32>
    tpu.vector_store %arg5[%c0_19, %c0_20], %30 {strides = array<i32>} : memref<32x128xf32, #tpu.memory_space<vmem>>, vector<32x128xf32>,
    return
  }
  func.func @transform_0(%arg0: i32, %arg1: i32) -> (i32, i32, i32) {
    %c0_i32 = arith.constant 0 : i32
    %c0_i32_0 = arith.constant 0 : i32
    return %arg0, %c0_i32, %arg1 : i32, i32, i32
  }
  func.func @transform_1(%arg0: i32, %arg1: i32) -> (i32, i32) {
    %c0_i32 = arith.constant 0 : i32
    %c0_i32_0 = arith.constant 0 : i32
    %c0_i32_1 = arith.constant 0 : i32
    return %c0_i32, %c0_i32_0 : i32, i32
  }
  func.func @transform_2(%arg0: i32, %arg1: i32) -> (i32, i32) {
    %c0_i32 = arith.constant 0 : i32
    %c0_i32_0 = arith.constant 0 : i32
    %c0_i32_1 = arith.constant 0 : i32
    return %c0_i32, %c0_i32_0 : i32, i32
  }
  func.func @transform_3(%arg0: i32, %arg1: i32) -> (i32, i32) {
    %c0_i32 = arith.constant 0 : i32
    return %arg0, %arg1 : i32, i32
  }
}

</mosaic_0001>

<llo_original>
// kernel: gated_temporal_conv.1
$region0: #{gated_temporal_conv.1}
  #allocation0 [shape = 'u32[]', space=smem, size = 0x4, offset = 0x4, fixed_abs, tag = 'smem constant byte address 0x4 - core index']
  #allocation1 [shape = 'u32[144,128]{1,0:T(1,128)}', space=vmem, size = 0x12000, scoped, tag = 'internal scratch']
  %s0 = inlined_call_operand.vmem [shape: f32[32,4,16], index: 0, kind: input, shape index: {}]
  %s1 = inlined_call_operand.vmem [shape: f32[72,256], index: 1, kind: input, shape index: {}]
  %s2 = inlined_call_operand.vmem [shape: f32[1,256], index: 2, kind: input, shape index: {}]
  %s3 = inlined_call_operand.vmem [shape: f32[32,128], index: 3, kind: output, shape index: {}]
  %s4 = sld [smem:[#allocation0]]
  $region22: #{gated_temporal_conv.1} parent=0
    _
  %s6 = ssub.s32 1, %s4
  %s7 = scalar_select 0, %s6, %s4
  // Predicated region
  $region2: #{gated_temporal_conv.1} parent=0 // pred_check
    _
  $region3: #{gated_temporal_conv.1} parent=0 // pred_check_branch
    %9 = sbr.rel (0) target = $region5
  $region4: #{gated_temporal_conv.1} parent=0 // pred_region
    _
  $region5: #{gated_temporal_conv.1} parent=0 // pred_fallthru
    _
  // Predicated region
  $region6: #{gated_temporal_conv.1} parent=0 // pred_check
    _
  $region7: #{gated_temporal_conv.1} parent=0 // pred_check_branch
    %11 = sbr.rel (0) target = $region9
  $region8: #{gated_temporal_conv.1} parent=0 // pred_region
    _
  $region9: #{gated_temporal_conv.1} parent=0 // pred_fallthru
    _
  // Predicated region
  $region10: #{gated_temporal_conv.1} parent=0 // pred_check
    _
  $region11: #{gated_temporal_conv.1} parent=0 // pred_check_branch
    %13 = sbr.rel (0) target = $region13
  $region12: #{gated_temporal_conv.1} parent=0 // pred_region
    _
  $region13: #{gated_temporal_conv.1} parent=0 // pred_fallthru
    _
  %v14 = vld [vmem:[%s0] sm:$0x1]
  %v15 = vld [vmem:[%s0 + $0x4] sm:$0x1]
  %v16 = vld [vmem:[%s0 + $0x8] sm:$0x1]
  %v17 = vld [vmem:[%s0 + $0xc] sm:$0x1]
  %v18 = vld [vmem:[%s0 + $0x10] sm:$0x1]
  %v19 = vld [vmem:[%s0 + $0x14] sm:$0x1]
  %v20 = vld [vmem:[%s0 + $0x18] sm:$0x1]
  %v21 = vld [vmem:[%s0 + $0x1c] sm:$0x1]
  %v22 = vld [vmem:[%s0 + $0x20] sm:$0x1]
  %v23 = vld [vmem:[%s0 + $0x24] sm:$0x1]
  %v24 = vld [vmem:[%s0 + $0x28] sm:$0x1]
  %v25 = vld [vmem:[%s0 + $0x2c] sm:$0x1]
  %v26 = vld [vmem:[%s0 + $0x30] sm:$0x1]
  %v27 = vld [vmem:[%s0 + $0x34] sm:$0x1]
  %v28 = vld [vmem:[%s0 + $0x38] sm:$0x1]
  %v29 = vld [vmem:[%s0 + $0x3c] sm:$0x1]
  %v30 = vld [vmem:[%s0 + $0x40] sm:$0x1]
  %v31 = vld [vmem:[%s0 + $0x44] sm:$0x1]
  %v32 = vld [vmem:[%s0 + $0x48] sm:$0x1]
  %v33 = vld [vmem:[%s0 + $0x4c] sm:$0x1]
  %v34 = vld [vmem:[%s0 + $0x50] sm:$0x1]
  %v35 = vld [vmem:[%s0 + $0x54] sm:$0x1]
  %v36 = vld [vmem:[%s0 + $0x58] sm:$0x1]
  %v37 = vld [vmem:[%s0 + $0x5c] sm:$0x1]
  %v38 = vld [vmem:[%s0 + $0x60] sm:$0x1]
  %v39 = vld [vmem:[%s0 + $0x64] sm:$0x1]
  %v40 = vld [vmem:[%s0 + $0x68] sm:$0x1]
  %v41 = vld [vmem:[%s0 + $0x6c] sm:$0x1]
  %v42 = vld [vmem:[%s0 + $0x70] sm:$0x1]
  %v43 = vld [vmem:[%s0 + $0x74] sm:$0x1]
  %v44 = vld [vmem:[%s0 + $0x78] sm:$0x1]
  %v45 = vld [vmem:[%s0 + $0x7c] sm:$0x1]
  %v46 = vld [vmem:[%s1] sm:$0xfc]
  %v47 = vld [vmem:[%s1 + $0x8] sm:$0xfc]
  %v48 = vld [vmem:[%s1 + $0x10] sm:$0xff]
  %v49 = vld [vmem:[%s1 + $0x18] sm:$0xff]
  %v50 = vld [vmem:[%s1 + $0x20] sm:$0x3]
  %v51 = vld [vmem:[%s1 + $0x28] sm:$0x3]
  %v52 = vld [vmem:[%s0 + $0x1] sm:$0x1]
  %v53 = vld [vmem:[%s0 + $0x5] sm:$0x1]
  %v54 = vld [vmem:[%s0 + $0x9] sm:$0x1]
  %v55 = vld [vmem:[%s0 + $0xd] sm:$0x1]
  %v56 = vld [vmem:[%s0 + $0x11] sm:$0x1]
  %v57 = vld [vmem:[%s0 + $0x15] sm:$0x1]
  %v58 = vld [vmem:[%s0 + $0x19] sm:$0x1]
  %v59 = vld [vmem:[%s0 + $0x1d] sm:$0x1]
  %v60 = vld [vmem:[%s0 + $0x21] sm:$0x1]
  %v61 = vld [vmem:[%s0 + $0x25] sm:$0x1]
  %v62 = vld [vmem:[%s0 + $0x29] sm:$0x1]
  %v63 = vld [vmem:[%s0 + $0x2d] sm:$0x1]
  %v64 = vld [vmem:[%s0 + $0x31] sm:$0x1]
  %v65 = vld [vmem:[%s0 + $0x35] sm:$0x1]
  %v66 = vld [vmem:[%s0 + $0x39] sm:$0x1]
  %v67 = vld [vmem:[%s0 + $0x3d] sm:$0x1]
  %v68 = vld [vmem:[%s0 + $0x41] sm:$0x1]
  %v69 = vld [vmem:[%s0 + $0x45] sm:$0x1]
  %v70 = vld [vmem:[%s0 + $0x49] sm:$0x1]
  %v71 = vld [vmem:[%s0 + $0x4d] sm:$0x1]
  %v72 = vld [vmem:[%s0 + $0x51] sm:$0x1]
  %v73 = vld [vmem:[%s0 + $0x55] sm:$0x1]
  %v74 = vld [vmem:[%s0 + $0x59] sm:$0x1]
  %v75 = vld [vmem:[%s0 + $0x5d] sm:$0x1]
  %v76 = vld [vmem:[%s0 + $0x61] sm:$0x1]
  %v77 = vld [vmem:[%s0 + $0x65] sm:$0x1]
  %v78 = vld [vmem:[%s0 + $0x69] sm:$0x1]
  %v79 = vld [vmem:[%s0 + $0x6d] sm:$0x1]
  %v80 = vld [vmem:[%s0 + $0x71] sm:$0x1]
  %v81 = vld [vmem:[%s0 + $0x75] sm:$0x1]
  %v82 = vld [vmem:[%s0 + $0x79] sm:$0x1]
  %v83 = vld [vmem:[%s0 + $0x7d] sm:$0x1]
  %v84 = vld [vmem:[%s1 + $0x20] sm:$0xf0]
  %v85 = vld [vmem:[%s1 + $0x28] sm:$0xf0]
  %v86 = vld [vmem:[%s1 + $0x30] sm:$0xff]
  %v87 = vld [vmem:[%s1 + $0x38] sm:$0xff]
  %v88 = vld [vmem:[%s1 + $0x40] sm:$0xf]
  %v89 = vld [vmem:[%s1 + $0x48] sm:$0xf]
  %v122 = vrot.slane %v53, 7
  %vm123 = vcmask 1041409
  %v124 = vsel %vm123, %v122, %v52
  %v125 = vrot.slane %v54, 6
  %vm126 = vcmask 1042434
  %v127 = vsel %vm126, %v125, %v124
  %v128 = vrot.slane %v55, 5
  %vm129 = vcmask 1043459
  %v130 = vsel %vm129, %v128, %v127
  %v131 = vrot.slane %v56, 4
  %vm132 = vcmask 1044484
  %v133 = vsel %vm132, %v131, %v130
  %v134 = vrot.slane %v57, 3
  %vm135 = vcmask 1045509
  %v136 = vsel %vm135, %v134, %v133
  %v137 = vrot.slane %v58, 2
  %vm138 = vcmask 1046534
  %v139 = vsel %vm138, %v137, %v136
  %v140 = vrot.slane %v59, 1
  %vm141 = vcmask 1047559
  %v142 = vsel %vm141, %v140, %v139
  %v143 = vrot.slane %v61, 7
  %v144 = vsel %vm123, %v143, %v60
  %v145 = vrot.slane %v62, 6
  %v146 = vsel %vm126, %v145, %v144
  %v147 = vrot.slane %v63, 5
  %v148 = vsel %vm129, %v147, %v146
  %v149 = vrot.slane %v64, 4
  %v150 = vsel %vm132, %v149, %v148
  %v151 = vrot.slane %v65, 3
  %v152 = vsel %vm135, %v151, %v150
  %v153 = vrot.slane %v66, 2
  %v154 = vsel %vm138, %v153, %v152
  %v155 = vrot.slane %v67, 1
  %v156 = vsel %vm141, %v155, %v154
  %v157 = vrot.slane %v69, 7
  %v158 = vsel %vm123, %v157, %v68
  %v159 = vrot.slane %v70, 6
  %v160 = vsel %vm126, %v159, %v158
  %v161 = vrot.slane %v71, 5
  %v162 = vsel %vm129, %v161, %v160
  %v163 = vrot.slane %v72, 4
  %v164 = vsel %vm132, %v163, %v162
  %v165 = vrot.slane %v73, 3
  %v166 = vsel %vm135, %v165, %v164
  %v167 = vrot.slane %v74, 2
  %v168 = vsel %vm138, %v167, %v166
  %v169 = vrot.slane %v75, 1
  %v170 = vsel %vm141, %v169, %v168
  %v171 = vrot.slane %v77, 7
  %v172 = vsel %vm123, %v171, %v76
  %v173 = vrot.slane %v78, 6
  %v174 = vsel %vm126, %v173, %v172
  %v175 = vrot.slane %v79, 5
  %v176 = vsel %vm129, %v175, %v174
  %v177 = vrot.slane %v80, 4
  %v178 = vsel %vm132, %v177, %v176
  %v179 = vrot.slane %v81, 3
  %v180 = vsel %vm135, %v179, %v178
  %v181 = vrot.slane %v82, 2
  %v182 = vsel %vm138, %v181, %v180
  %v183 = vrot.slane %v83, 1
  %v184 = vsel %vm141, %v183, %v182
  %vm191 = vcmask 1043456
  %v192 = vrot.slane %v84, 4
  %v193 = vrot.slane %v86, 4
  %v194 = vsel %vm191, %v192, %v193
  %v195 = vrot.slane %v85, 4
  %v196 = vrot.slane %v87, 4
  %v197 = vsel %vm191, %v195, %v196
  %v198 = vrot.slane %v88, 4
  %v199 = vsel %vm191, %v193, %v198
  %v200 = vrot.slane %v89, 4
  %v201 = vsel %vm191, %v196, %v200
  %vm206 = vcmask 130048
  %v207 = vsel %vm206, %v142, 0
  %v209 = vsel %vm206, %v156, 0
  %v211 = vsel %vm206, %v170, 0
  %v213 = vsel %vm206, %v184, 0
  %215 = vmatprep.subr.mxu0 0.0
  %216 = vmatpush1.msra.mxu0 0.0
  %217 = vmatprep.subr.mxu0 0.0
  %218 = vmatpush1.msra.mxu0 0.0
  %219 = vmatprep.subr.mxu0 0.0
  %220 = vmatpush1.msra.mxu0 0.0
  %221 = vmatprep.subr.mxu0 0.0
  %222 = vmatpush1.msra.mxu0 0.0
  %223 = vmatprep.subr.mxu0 0.0
  %224 = vmatpush1.msra.mxu0 0.0
  %225 = vmatprep.subr.mxu0 0.0
  %226 = vmatpush1.msra.mxu0 0.0
  %227 = vmatprep.subr.mxu0 0.0
  %228 = vmatpush1.msra.mxu0 0.0
  %229 = vmatprep.subr.mxu0 0.0
  %230 = vmatpush1.msra.mxu0 0.0
  %231 = vmatprep.subr.mxu0 0.0
  %232 = vmatpush1.msra.mxu0 0.0
  %233 = vmatprep.subr.mxu0 0.0
  %234 = vmatpush1.msra.mxu0 0.0
  %235 = vmatprep.subr.mxu0 0.0
  %236 = vmatpush1.msra.mxu0 0.0
  %237 = vmatprep.subr.mxu0 0.0
  %238 = vmatpush1.msra.mxu0 0.0
  %239 = vmatprep.subr.mxu0 0.0
  %240 = vmatpush1.msra.mxu0 0.0
  %241 = vmatprep.subr.mxu0 0.0
  %242 = vmatpush1.msra.mxu0 0.0
  %243 = vmatprep.subr.mxu0 %v201
  %244 = vmatpush1.msra.mxu0 %v199
  %245 = vmatprep.subr.mxu0 %v197
  %246 = vmatpush1.msra.mxu0 %v194
  %247 = vmatprep.subr.mxu0 0.0
  %248 = vmatpush2.msra.mxu0 0.0
  %249 = vmatprep.subr.mxu0 0.0
  %250 = vmatpush2.msra.mxu0 0.0
  %251 = vmatprep.subr.mxu0 0.0
  %252 = vmatpush2.msra.mxu0 0.0
  %253 = vmatprep.subr.mxu0 0.0
  %254 = vmatpush2.msra.mxu0 0.0
  %255 = vmatprep.subr.mxu0 0.0
  %256 = vmatpush2.msra.mxu0 0.0
  %257 = vmatprep.subr.mxu0 0.0
  %258 = vmatpush2.msra.mxu0 0.0
  %259 = vmatprep.subr.mxu0 0.0
  %260 = vmatpush2.msra.mxu0 0.0
  %261 = vmatprep.subr.mxu0 0.0
  %262 = vmatpush2.msra.mxu0 0.0
  %263 = vmatprep.subr.mxu0 0.0
  %264 = vmatpush2.msra.mxu0 0.0
  %265 = vmatprep.subr.mxu0 0.0
  %266 = vmatpush2.msra.mxu0 0.0
  %267 = vmatprep.subr.mxu0 0.0
  %268 = vmatpush2.msra.mxu0 0.0
  %269 = vmatprep.subr.mxu0 0.0
  %270 = vmatpush2.msra.mxu0 0.0
  %271 = vmatprep.subr.mxu0 0.0
  %272 = vmatpush2.msra.mxu0 0.0
  %273 = vmatprep.subr.mxu0 0.0
  %274 = vmatpush2.msra.mxu0 0.0
  %275 = vmatprep.subr.mxu0 0.0
  %276 = vmatpush2.msra.mxu0 0.0
  %277 = vmatprep.subr.mxu0 0.0
  %278 = vmatpush2.msra.mxu0 0.0
  %279 = vmatprep.mubr.f32.mxu0 0.0
  %280 = vmatmul.mubr.f32.gmra.mxu0 %v207
  %v281 = vpop.f32.mrf.mxu0
  %v282 = vadd.f32 0.0, %v281
  %v283 = vpop.f32.mrf.mxu0
  %v284 = vadd.f32 0.0, %v283
  %285 = vmatprep.mubr.f32.mxu0 0.0
  %286 = vmatmul.mubr.f32.gmra.mxu0 %v209
  %v287 = vpop.f32.mrf.mxu0
  %v288 = vadd.f32 0.0, %v287
  %v289 = vpop.f32.mrf.mxu0
  %v290 = vadd.f32 0.0, %v289
  %291 = vmatprep.mubr.f32.mxu0 0.0
  %292 = vmatmul.mubr.f32.gmra.mxu0 %v211
  %v293 = vpop.f32.mrf.mxu0
  %v294 = vadd.f32 0.0, %v293
  %v295 = vpop.f32.mrf.mxu0
  %v296 = vadd.f32 0.0, %v295
  %297 = vmatprep.mubr.f32.mxu0 0.0
  %298 = vmatmul.mubr.f32.gmra.mxu0 %v213
  %v299 = vpop.f32.mrf.mxu0
  %v300 = vadd.f32 0.0, %v299
  %v301 = vpop.f32.mrf.mxu0
  %v302 = vadd.f32 0.0, %v301
  %303 = vdwg.mxu0
  %v336 = vrot.slane %v15, 7
  %v337 = vsel %vm123, %v336, %v14
  %v338 = vrot.slane %v16, 6
  %v339 = vsel %vm126, %v338, %v337
  %v340 = vrot.slane %v17, 5
  %v341 = vsel %vm129, %v340, %v339
  %v342 = vrot.slane %v18, 4
  %v343 = vsel %vm132, %v342, %v341
  %v344 = vrot.slane %v19, 3
  %v345 = vsel %vm135, %v344, %v343
  %v346 = vrot.slane %v20, 2
  %v347 = vsel %vm138, %v346, %v345
  %v348 = vrot.slane %v21, 1
  %v349 = vsel %vm141, %v348, %v347
  %v350 = vrot.slane %v23, 7
  %v351 = vsel %vm123, %v350, %v22
  %v352 = vrot.slane %v24, 6
  %v353 = vsel %vm126, %v352, %v351
  %v354 = vrot.slane %v25, 5
  %v355 = vsel %vm129, %v354, %v353
  %v356 = vrot.slane %v26, 4
  %v357 = vsel %vm132, %v356, %v355
  %v358 = vrot.slane %v27, 3
  %v359 = vsel %vm135, %v358, %v357
  %v360 = vrot.slane %v28, 2
  %v361 = vsel %vm138, %v360, %v359
  %v362 = vrot.slane %v29, 1
  %v363 = vsel %vm141, %v362, %v361
  %v364 = vrot.slane %v31, 7
  %v365 = vsel %vm123, %v364, %v30
  %v366 = vrot.slane %v32, 6
  %v367 = vsel %vm126, %v366, %v365
  %v368 = vrot.slane %v33, 5
  %v369 = vsel %vm129, %v368, %v367
  %v370 = vrot.slane %v34, 4
  %v371 = vsel %vm132, %v370, %v369
  %v372 = vrot.slane %v35, 3
  %v373 = vsel %vm135, %v372, %v371
  %v374 = vrot.slane %v36, 2
  %v375 = vsel %vm138, %v374, %v373
  %v376 = vrot.slane %v37, 1
  %v377 = vsel %vm141, %v376, %v375
  %v378 = vrot.slane %v39, 7
  %v379 = vsel %vm123, %v378, %v38
  %v380 = vrot.slane %v40, 6
  %v381 = vsel %vm126, %v380, %v379
  %v382 = vrot.slane %v41, 5
  %v383 = vsel %vm129, %v382, %v381
  %v384 = vrot.slane %v42, 4
  %v385 = vsel %vm132, %v384, %v383
  %v386 = vrot.slane %v43, 3
  %v387 = vsel %vm135, %v386, %v385
  %v388 = vrot.slane %v44, 2
  %v389 = vsel %vm138, %v388, %v387
  %v390 = vrot.slane %v45, 1
  %v391 = vsel %vm141, %v390, %v389
  %vm398 = vcmask 1045504
  %v399 = vrot.slane %v46, 2
  %v400 = vrot.slane %v48, 2
  %v401 = vsel %vm398, %v399, %v400
  %v402 = vrot.slane %v47, 2
  %v403 = vrot.slane %v49, 2
  %v404 = vsel %vm398, %v402, %v403
  %v405 = vrot.slane %v50, 2
  %v406 = vsel %vm398, %v400, %v405
  %v407 = vrot.slane %v51, 2
  %v408 = vsel %vm398, %v403, %v407
  %v413 = vsel %vm206, %v349, 0
  %v415 = vsel %vm206, %v363, 0
  %v417 = vsel %vm206, %v377, 0
  %v419 = vsel %vm206, %v391, 0
  %421 = vmatprep.subr.mxu0 0.0
  %422 = vmatpush1.msra.mxu0 0.0
  %423 = vmatprep.subr.mxu0 0.0
  %424 = vmatpush1.msra.mxu0 0.0
  %425 = vmatprep.subr.mxu0 0.0
  %426 = vmatpush1.msra.mxu0 0.0
  %427 = vmatprep.subr.mxu0 0.0
  %428 = vmatpush1.msra.mxu0 0.0
  %429 = vmatprep.subr.mxu0 0.0
  %430 = vmatpush1.msra.mxu0 0.0
  %431 = vmatprep.subr.mxu0 0.0
  %432 = vmatpush1.msra.mxu0 0.0
  %433 = vmatprep.subr.mxu0 0.0
  %434 = vmatpush1.msra.mxu0 0.0
  %435 = vmatprep.subr.mxu0 0.0
  %436 = vmatpush1.msra.mxu0 0.0
  %437 = vmatprep.subr.mxu0 0.0
  %438 = vmatpush1.msra.mxu0 0.0
  %439 = vmatprep.subr.mxu0 0.0
  %440 = vmatpush1.msra.mxu0 0.0
  %441 = vmatprep.subr.mxu0 0.0
  %442 = vmatpush1.msra.mxu0 0.0
  %443 = vmatprep.subr.mxu0 0.0
  %444 = vmatpush1.msra.mxu0 0.0
  %445 = vmatprep.subr.mxu0 0.0
  %446 = vmatpush1.msra.mxu0 0.0
  %447 = vmatprep.subr.mxu0 0.0
  %448 = vmatpush1.msra.mxu0 0.0
  %449 = vmatprep.subr.mxu0 %v408
  %450 = vmatpush1.msra.mxu0 %v406
  %451 = vmatprep.subr.mxu0 %v404
  %452 = vmatpush1.msra.mxu0 %v401
  %453 = vmatprep.subr.mxu0 0.0
  %454 = vmatpush2.msra.mxu0 0.0
  %455 = vmatprep.subr.mxu0 0.0
  %456 = vmatpush2.msra.mxu0 0.0
  %457 = vmatprep.subr.mxu0 0.0
  %458 = vmatpush2.msra.mxu0 0.0
  %459 = vmatprep.subr.mxu0 0.0
  %460 = vmatpush2.msra.mxu0 0.0
  %461 = vmatprep.subr.mxu0 0.0
  %462 = vmatpush2.msra.mxu0 0.0
  %463 = vmatprep.subr.mxu0 0.0
  %464 = vmatpush2.msra.mxu0 0.0
  %465 = vmatprep.subr.mxu0 0.0
  %466 = vmatpush2.msra.mxu0 0.0
  %467 = vmatprep.subr.mxu0 0.0
  %468 = vmatpush2.msra.mxu0 0.0
  %469 = vmatprep.subr.mxu0 0.0
  %470 = vmatpush2.msra.mxu0 0.0
  %471 = vmatprep.subr.mxu0 0.0
  %472 = vmatpush2.msra.mxu0 0.0
  %473 = vmatprep.subr.mxu0 0.0
  %474 = vmatpush2.msra.mxu0 0.0
  %475 = vmatprep.subr.mxu0 0.0
  %476 = vmatpush2.msra.mxu0 0.0
  %477 = vmatprep.subr.mxu0 0.0
  %478 = vmatpush2.msra.mxu0 0.0
  %479 = vmatprep.subr.mxu0 0.0
  %480 = vmatpush2.msra.mxu0 0.0
  %481 = vmatprep.subr.mxu0 0.0
  %482 = vmatpush2.msra.mxu0 0.0
  %483 = vmatprep.subr.mxu0 0.0
  %484 = vmatpush2.msra.mxu0 0.0
  %485 = vmatprep.mubr.f32.mxu0 0.0
  %486 = vmatmul.mubr.f32.gmra.mxu0 %v413
  %v487 = vpop.f32.mrf.mxu0
  %v488 = vadd.f32 %v282, %v487
  %v489 = vpop.f32.mrf.mxu0
  %v490 = vadd.f32 %v284, %v489
  %491 = vmatprep.mubr.f32.mxu0 0.0
  %492 = vmatmul.mubr.f32.gmra.mxu0 %v415
  %v493 = vpop.f32.mrf.mxu0
  %v494 = vadd.f32 %v288, %v493
  %v495 = vpop.f32.mrf.mxu0
  %v496 = vadd.f32 %v290, %v495
  %497 = vmatprep.mubr.f32.mxu0 0.0
  %498 = vmatmul.mubr.f32.gmra.mxu0 %v417
  %v499 = vpop.f32.mrf.mxu0
  %v500 = vadd.f32 %v294, %v499
  %v501 = vpop.f32.mrf.mxu0
  %v502 = vadd.f32 %v296, %v501
  %503 = vmatprep.mubr.f32.mxu0 0.0
  %504 = vmatmul.mubr.f32.gmra.mxu0 %v419
  %v505 = vpop.f32.mrf.mxu0
  %v506 = vadd.f32 %v300, %v505
  %v507 = vpop.f32.mrf.mxu0
  %v508 = vadd.f32 %v302, %v507
  %509 = vdwg.mxu0
  %v510 = vld [vmem:[%s0 + $0x2] sm:$0x1]
  %v511 = vld [vmem:[%s0 + $0x6] sm:$0x1]
  %v512 = vld [vmem:[%s0 + $0xa] sm:$0x1]
  %v513 = vld [vmem:[%s0 + $0xe] sm:$0x1]
  %v514 = vld [vmem:[%s0 + $0x12] sm:$0x1]
  %v515 = vld [vmem:[%s0 + $0x16] sm:$0x1]
  %v516 = vld [vmem:[%s0 + $0x1a] sm:$0x1]
  %v517 = vld [vmem:[%s0 + $0x1e] sm:$0x1]
  %v518 = vld [vmem:[%s0 + $0x22] sm:$0x1]
  %v519 = vld [vmem:[%s0 + $0x26] sm:$0x1]
  %v520 = vld [vmem:[%s0 + $0x2a] sm:$0x1]
  %v521 = vld [vmem:[%s0 + $0x2e] sm:$0x1]
  %v522 = vld [vmem:[%s0 + $0x32] sm:$0x1]
  %v523 = vld [vmem:[%s0 + $0x36] sm:$0x1]
  %v524 = vld [vmem:[%s0 + $0x3a] sm:$0x1]
  %v525 = vld [vmem:[%s0 + $0x3e] sm:$0x1]
  %v526 = vld [vmem:[%s0 + $0x42] sm:$0x1]
  %v527 = vld [vmem:[%s0 + $0x46] sm:$0x1]
  %v528 = vld [vmem:[%s0 + $0x4a] sm:$0x1]
  %v529 = vld [vmem:[%s0 + $0x4e] sm:$0x1]
  %v530 = vld [vmem:[%s0 + $0x52] sm:$0x1]
  %v531 = vld [vmem:[%s0 + $0x56] sm:$0x1]
  %v532 = vld [vmem:[%s0 + $0x5a] sm:$0x1]
  %v533 = vld [vmem:[%s0 + $0x5e] sm:$0x1]
  %v534 = vld [vmem:[%s0 + $0x62] sm:$0x1]
  %v535 = vld [vmem:[%s0 + $0x66] sm:$0x1]
  %v536 = vld [vmem:[%s0 + $0x6a] sm:$0x1]
  %v537 = vld [vmem:[%s0 + $0x6e] sm:$0x1]
  %v538 = vld [vmem:[%s0 + $0x72] sm:$0x1]
  %v539 = vld [vmem:[%s0 + $0x76] sm:$0x1]
  %v540 = vld [vmem:[%s0 + $0x7a] sm:$0x1]
  %v541 = vld [vmem:[%s0 + $0x7e] sm:$0x1]
  %v542 = vld [vmem:[%s1 + $0x40] sm:$0xc0]
  %v543 = vld [vmem:[%s1 + $0x48] sm:$0xc0]
  %v544 = vld [vmem:[%s1 + $0x50] sm:$0xff]
  %v545 = vld [vmem:[%s1 + $0x58] sm:$0xff]
  %v546 = vld [vmem:[%s1 + $0x60] sm:$0x3f]
  %v547 = vld [vmem:[%s1 + $0x68] sm:$0x3f]
  %v580 = vrot.slane %v511, 7
  %v581 = vsel %vm123, %v580, %v510
  %v582 = vrot.slane %v512, 6
  %v583 = vsel %vm126, %v582, %v581
  %v584 = vrot.slane %v513, 5
  %v585 = vsel %vm129, %v584, %v583
  %v586 = vrot.slane %v514, 4
  %v587 = vsel %vm132, %v586, %v585
  %v588 = vrot.slane %v515, 3
  %v589 = vsel %vm135, %v588, %v587
  %v590 = vrot.slane %v516, 2
  %v591 = vsel %vm138, %v590, %v589
  %v592 = vrot.slane %v517, 1
  %v593 = vsel %vm141, %v592, %v591
  %v594 = vrot.slane %v519, 7
  %v595 = vsel %vm123, %v594, %v518
  %v596 = vrot.slane %v520, 6
  %v597 = vsel %vm126, %v596, %v595
  %v598 = vrot.slane %v521, 5
  %v599 = vsel %vm129, %v598, %v597
  %v600 = vrot.slane %v522, 4
  %v601 = vsel %vm132, %v600, %v599
  %v602 = vrot.slane %v523, 3
  %v603 = vsel %vm135, %v602, %v601
  %v604 = vrot.slane %v524, 2
  %v605 = vsel %vm138, %v604, %v603
  %v606 = vrot.slane %v525, 1
  %v607 = vsel %vm141, %v606, %v605
  %v608 = vrot.slane %v527, 7
  %v609 = vsel %vm123, %v608, %v526
  %v610 = vrot.slane %v528, 6
  %v611 = vsel %vm126, %v610, %v609
  %v612 = vrot.slane %v529, 5
  %v613 = vsel %vm129, %v612, %v611
  %v614 = vrot.slane %v530, 4
  %v615 = vsel %vm132, %v614, %v613
  %v616 = vrot.slane %v531, 3
  %v617 = vsel %vm135, %v616, %v615
  %v618 = vrot.slane %v532, 2
  %v619 = vsel %vm138, %v618, %v617
  %v620 = vrot.slane %v533, 1
  %v621 = vsel %vm141, %v620, %v619
  %v622 = vrot.slane %v535, 7
  %v623 = vsel %vm123, %v622, %v534
  %v624 = vrot.slane %v536, 6
  %v625 = vsel %vm126, %v624, %v623
  %v626 = vrot.slane %v537, 5
  %v627 = vsel %vm129, %v626, %v625
  %v628 = vrot.slane %v538, 4
  %v629 = vsel %vm132, %v628, %v627
  %v630 = vrot.slane %v539, 3
  %v631 = vsel %vm135, %v630, %v629
  %v632 = vrot.slane %v540, 2
  %v633 = vsel %vm138, %v632, %v631
  %v634 = vrot.slane %v541, 1
  %v635 = vsel %vm141, %v634, %v633
  %vm642 = vcmask 1041408
  %v643 = vrot.slane %v542, 6
  %v644 = vrot.slane %v544, 6
  %v645 = vsel %vm642, %v643, %v644
  %v646 = vrot.slane %v543, 6
  %v647 = vrot.slane %v545, 6
  %v648 = vsel %vm642, %v646, %v647
  %v649 = vrot.slane %v546, 6
  %v650 = vsel %vm642, %v644, %v649
  %v651 = vrot.slane %v547, 6
  %v652 = vsel %vm642, %v647, %v651
  %v657 = vsel %vm206, %v593, 0
  %v659 = vsel %vm206, %v607, 0
  %v661 = vsel %vm206, %v621, 0
  %v663 = vsel %vm206, %v635, 0
  %665 = vmatprep.subr.mxu0 0.0
  %666 = vmatpush1.msra.mxu0 0.0
  %667 = vmatprep.subr.mxu0 0.0
  %668 = vmatpush1.msra.mxu0 0.0
  %669 = vmatprep.subr.mxu0 0.0
  %670 = vmatpush1.msra.mxu0 0.0
  %671 = vmatprep.subr.mxu0 0.0
  %672 = vmatpush1.msra.mxu0 0.0
  %673 = vmatprep.subr.mxu0 0.0
  %674 = vmatpush1.msra.mxu0 0.0
  %675 = vmatprep.subr.mxu0 0.0
  %676 = vmatpush1.msra.mxu0 0.0
  %677 = vmatprep.subr.mxu0 0.0
  %678 = vmatpush1.msra.mxu0 0.0
  %679 = vmatprep.subr.mxu0 0.0
  %680 = vmatpush1.msra.mxu0 0.0
  %681 = vmatprep.subr.mxu0 0.0
  %682 = vmatpush1.msra.mxu0 0.0
  %683 = vmatprep.subr.mxu0 0.0
  %684 = vmatpush1.msra.mxu0 0.0
  %685 = vmatprep.subr.mxu0 0.0
  %686 = vmatpush1.msra.mxu0 0.0
  %687 = vmatprep.subr.mxu0 0.0
  %688 = vmatpush1.msra.mxu0 0.0
  %689 = vmatprep.subr.mxu0 0.0
  %690 = vmatpush1.msra.mxu0 0.0
  %691 = vmatprep.subr.mxu0 0.0
  %692 = vmatpush1.msra.mxu0 0.0
  %693 = vmatprep.subr.mxu0 %v652
  %694 = vmatpush1.msra.mxu0 %v650
  %695 = vmatprep.subr.mxu0 %v648
  %696 = vmatpush1.msra.mxu0 %v645
  %697 = vmatprep.subr.mxu0 0.0
  %698 = vmatpush2.msra.mxu0 0.0
  %699 = vmatprep.subr.mxu0 0.0
  %700 = vmatpush2.msra.mxu0 0.0
  %701 = vmatprep.subr.mxu0 0.0
  %702 = vmatpush2.msra.mxu0 0.0
  %703 = vmatprep.subr.mxu0 0.0
  %704 = vmatpush2.msra.mxu0 0.0
  %705 = vmatprep.subr.mxu0 0.0
  %706 = vmatpush2.msra.mxu0 0.0
  %707 = vmatprep.subr.mxu0 0.0
  %708 = vmatpush2.msra.mxu0 0.0
  %709 = vmatprep.subr.mxu0 0.0
  %710 = vmatpush2.msra.mxu0 0.0
  %711 = vmatprep.subr.mxu0 0.0
  %712 = vmatpush2.msra.mxu0 0.0
  %713 = vmatprep.subr.mxu0 0.0
  %714 = vmatpush2.msra.mxu0 0.0
  %715 = vmatprep.subr.mxu0 0.0
  %716 = vmatpush2.msra.mxu0 0.0
  %717 = vmatprep.subr.mxu0 0.0
  %718 = vmatpush2.msra.mxu0 0.0
  %719 = vmatprep.subr.mxu0 0.0
  %720 = vmatpush2.msra.mxu0 0.0
  %721 = vmatprep.subr.mxu0 0.0
  %722 = vmatpush2.msra.mxu0 0.0
  %723 = vmatprep.subr.mxu0 0.0
  %724 = vmatpush2.msra.mxu0 0.0
  %725 = vmatprep.subr.mxu0 0.0
  %726 = vmatpush2.msra.mxu0 0.0
  %727 = vmatprep.subr.mxu0 0.0
  %728 = vmatpush2.msra.mxu0 0.0
  %729 = vmatprep.mubr.f32.mxu0 0.0
  %730 = vmatmul.mubr.f32.gmra.mxu0 %v657
  %v731 = vpop.f32.mrf.mxu0
  %v732 = vadd.f32 0.0, %v731
  %v733 = vpop.f32.mrf.mxu0
  %v734 = vadd.f32 0.0, %v733
  %735 = vmatprep.mubr.f32.mxu0 0.0
  %736 = vmatmul.mubr.f32.gmra.mxu0 %v659
  %v737 = vpop.f32.mrf.mxu0
  %v738 = vadd.f32 0.0, %v737
  %v739 = vpop.f32.mrf.mxu0
  %v740 = vadd.f32 0.0, %v739
  %741 = vmatprep.mubr.f32.mxu0 0.0
  %742 = vmatmul.mubr.f32.gmra.mxu0 %v661
  %v743 = vpop.f32.mrf.mxu0
  %v744 = vadd.f32 0.0, %v743
  %v745 = vpop.f32.mrf.mxu0
  %v746 = vadd.f32 0.0, %v745
  %747 = vmatprep.mubr.f32.mxu0 0.0
  %748 = vmatmul.mubr.f32.gmra.mxu0 %v663
  %v749 = vpop.f32.mrf.mxu0
  %v750 = vadd.f32 0.0, %v749
  %v751 = vpop.f32.mrf.mxu0
  %v752 = vadd.f32 0.0, %v751
  %753 = vdwg.mxu0
  %v754 = vadd.f32 %v488, %v732
  %v755 = vadd.f32 %v490, %v734
  %v756 = vadd.f32 %v494, %v738
  %v757 = vadd.f32 %v496, %v740
  %v758 = vadd.f32 %v500, %v744
  %v759 = vadd.f32 %v502, %v746
  %v760 = vadd.f32 %v506, %v750
  %v761 = vadd.f32 %v508, %v752
  %v762 = vld [vmem:[%s0 + $0x3] sm:$0x1]
  %v763 = vld [vmem:[%s0 + $0x7] sm:$0x1]
  %v764 = vld [vmem:[%s0 + $0xb] sm:$0x1]
  %v765 = vld [vmem:[%s0 + $0xf] sm:$0x1]
  %v766 = vld [vmem:[%s0 + $0x13] sm:$0x1]
  %v767 = vld [vmem:[%s0 + $0x17] sm:$0x1]
  %v768 = vld [vmem:[%s0 + $0x1b] sm:$0x1]
  %v769 = vld [vmem:[%s0 + $0x1f] sm:$0x1]
  %v770 = vld [vmem:[%s0 + $0x23] sm:$0x1]
  %v771 = vld [vmem:[%s0 + $0x27] sm:$0x1]
  %v772 = vld [vmem:[%s0 + $0x2b] sm:$0x1]
  %v773 = vld [vmem:[%s0 + $0x2f] sm:$0x1]
  %v774 = vld [vmem:[%s0 + $0x33] sm:$0x1]
  %v775 = vld [vmem:[%s0 + $0x37] sm:$0x1]
  %v776 = vld [vmem:[%s0 + $0x3b] sm:$0x1]
  %v777 = vld [vmem:[%s0 + $0x3f] sm:$0x1]
  %v778 = vld [vmem:[%s0 + $0x43] sm:$0x1]
  %v779 = vld [vmem:[%s0 + $0x47] sm:$0x1]
  %v780 = vld [vmem:[%s0 + $0x4b] sm:$0x1]
  %v781 = vld [vmem:[%s0 + $0x4f] sm:$0x1]
  %v782 = vld [vmem:[%s0 + $0x53] sm:$0x1]
  %v783 = vld [vmem:[%s0 + $0x57] sm:$0x1]
  %v784 = vld [vmem:[%s0 + $0x5b] sm:$0x1]
  %v785 = vld [vmem:[%s0 + $0x5f] sm:$0x1]
  %v786 = vld [vmem:[%s0 + $0x63] sm:$0x1]
  %v787 = vld [vmem:[%s0 + $0x67] sm:$0x1]
  %v788 = vld [vmem:[%s0 + $0x6b] sm:$0x1]
  %v789 = vld [vmem:[%s0 + $0x6f] sm:$0x1]
  %v790 = vld [vmem:[%s0 + $0x73] sm:$0x1]
  %v791 = vld [vmem:[%s0 + $0x77] sm:$0x1]
  %v792 = vld [vmem:[%s0 + $0x7b] sm:$0x1]
  %v793 = vld [vmem:[%s0 + $0x7f] sm:$0x1]
  %v794 = vld [vmem:[%s1 + $0x70] sm:$0xff]
  %v795 = vld [vmem:[%s1 + $0x78] sm:$0xff]
  %v796 = vld [vmem:[%s1 + $0x80] sm:$0xff]
  %v797 = vld [vmem:[%s1 + $0x88] sm:$0xff]
  %v830 = vrot.slane %v763, 7
  %v831 = vsel %vm123, %v830, %v762
  %v832 = vrot.slane %v764, 6
  %v833 = vsel %vm126, %v832, %v831
  %v834 = vrot.slane %v765, 5
  %v835 = vsel %vm129, %v834, %v833
  %v836 = vrot.slane %v766, 4
  %v837 = vsel %vm132, %v836, %v835
  %v838 = vrot.slane %v767, 3
  %v839 = vsel %vm135, %v838, %v837
  %v840 = vrot.slane %v768, 2
  %v841 = vsel %vm138, %v840, %v839
  %v842 = vrot.slane %v769, 1
  %v843 = vsel %vm141, %v842, %v841
  %v844 = vrot.slane %v771, 7
  %v845 = vsel %vm123, %v844, %v770
  %v846 = vrot.slane %v772, 6
  %v847 = vsel %vm126, %v846, %v845
  %v848 = vrot.slane %v773, 5
  %v849 = vsel %vm129, %v848, %v847
  %v850 = vrot.slane %v774, 4
  %v851 = vsel %vm132, %v850, %v849
  %v852 = vrot.slane %v775, 3
  %v853 = vsel %vm135, %v852, %v851
  %v854 = vrot.slane %v776, 2
  %v855 = vsel %vm138, %v854, %v853
  %v856 = vrot.slane %v777, 1
  %v857 = vsel %vm141, %v856, %v855
  %v858 = vrot.slane %v779, 7
  %v859 = vsel %vm123, %v858, %v778
  %v860 = vrot.slane %v780, 6
  %v861 = vsel %vm126, %v860, %v859
  %v862 = vrot.slane %v781, 5
  %v863 = vsel %vm129, %v862, %v861
  %v864 = vrot.slane %v782, 4
  %v865 = vsel %vm132, %v864, %v863
  %v866 = vrot.slane %v783, 3
  %v867 = vsel %vm135, %v866, %v865
  %v868 = vrot.slane %v784, 2
  %v869 = vsel %vm138, %v868, %v867
  %v870 = vrot.slane %v785, 1
  %v871 = vsel %vm141, %v870, %v869
  %v872 = vrot.slane %v787, 7
  %v873 = vsel %vm123, %v872, %v786
  %v874 = vrot.slane %v788, 6
  %v875 = vsel %vm126, %v874, %v873
  %v876 = vrot.slane %v789, 5
  %v877 = vsel %vm129, %v876, %v875
  %v878 = vrot.slane %v790, 4
  %v879 = vsel %vm132, %v878, %v877
  %v880 = vrot.slane %v791, 3
  %v881 = vsel %vm135, %v880, %v879
  %v882 = vrot.slane %v792, 2
  %v883 = vsel %vm138, %v882, %v881
  %v884 = vrot.slane %v793, 1
  %v885 = vsel %vm141, %v884, %v883
  %v886 = vsel %vm206, %v843, 0
  %v888 = vsel %vm206, %v857, 0
  %v890 = vsel %vm206, %v871, 0
  %v892 = vsel %vm206, %v885, 0
  %894 = vmatprep.subr.mxu0 0.0
  %895 = vmatpush1.msra.mxu0 0.0
  %896 = vmatprep.subr.mxu0 0.0
  %897 = vmatpush1.msra.mxu0 0.0
  %898 = vmatprep.subr.mxu0 0.0
  %899 = vmatpush1.msra.mxu0 0.0
  %900 = vmatprep.subr.mxu0 0.0
  %901 = vmatpush1.msra.mxu0 0.0
  %902 = vmatprep.subr.mxu0 0.0
  %903 = vmatpush1.msra.mxu0 0.0
  %904 = vmatprep.subr.mxu0 0.0
  %905 = vmatpush1.msra.mxu0 0.0
  %906 = vmatprep.subr.mxu0 0.0
  %907 = vmatpush1.msra.mxu0 0.0
  %908 = vmatprep.subr.mxu0 0.0
  %909 = vmatpush1.msra.mxu0 0.0
  %910 = vmatprep.subr.mxu0 0.0
  %911 = vmatpush1.msra.mxu0 0.0
  %912 = vmatprep.subr.mxu0 0.0
  %913 = vmatpush1.msra.mxu0 0.0
  %914 = vmatprep.subr.mxu0 0.0
  %915 = vmatpush1.msra.mxu0 0.0
  %916 = vmatprep.subr.mxu0 0.0
  %917 = vmatpush1.msra.mxu0 0.0
  %918 = vmatprep.subr.mxu0 0.0
  %919 = vmatpush1.msra.mxu0 0.0
  %920 = vmatprep.subr.mxu0 0.0
  %921 = vmatpush1.msra.mxu0 0.0
  %922 = vmatprep.subr.mxu0 %v797
  %923 = vmatpush1.msra.mxu0 %v796
  %924 = vmatprep.subr.mxu0 %v795
  %925 = vmatpush1.msra.mxu0 %v794
  %926 = vmatprep.subr.mxu0 0.0
  %927 = vmatpush2.msra.mxu0 0.0
  %928 = vmatprep.subr.mxu0 0.0
  %929 = vmatpush2.msra.mxu0 0.0
  %930 = vmatprep.subr.mxu0 0.0
  %931 = vmatpush2.msra.mxu0 0.0
  %932 = vmatprep.subr.mxu0 0.0
  %933 = vmatpush2.msra.mxu0 0.0
  %934 = vmatprep.subr.mxu0 0.0
  %935 = vmatpush2.msra.mxu0 0.0
  %936 = vmatprep.subr.mxu0 0.0
  %937 = vmatpush2.msra.mxu0 0.0
  %938 = vmatprep.subr.mxu0 0.0
  %939 = vmatpush2.msra.mxu0 0.0
  %940 = vmatprep.subr.mxu0 0.0
  %941 = vmatpush2.msra.mxu0 0.0
  %942 = vmatprep.subr.mxu0 0.0
  %943 = vmatpush2.msra.mxu0 0.0
  %944 = vmatprep.subr.mxu0 0.0
  %945 = vmatpush2.msra.mxu0 0.0
  %946 = vmatprep.subr.mxu0 0.0
  %947 = vmatpush2.msra.mxu0 0.0
  %948 = vmatprep.subr.mxu0 0.0
  %949 = vmatpush2.msra.mxu0 0.0
  %950 = vmatprep.subr.mxu0 0.0
  %951 = vmatpush2.msra.mxu0 0.0
  %952 = vmatprep.subr.mxu0 0.0
  %953 = vmatpush2.msra.mxu0 0.0
  %954 = vmatprep.subr.mxu0 0.0
  %955 = vmatpush2.msra.mxu0 0.0
  %956 = vmatprep.subr.mxu0 0.0
  %957 = vmatpush2.msra.mxu0 0.0
  %958 = vmatprep.mubr.f32.mxu0 0.0
  %959 = vmatmul.mubr.f32.gmra.mxu0 %v886
  %v960 = vpop.f32.mrf.mxu0
  %v961 = vadd.f32 0.0, %v960
  %v962 = vpop.f32.mrf.mxu0
  %v963 = vadd.f32 0.0, %v962
  %964 = vmatprep.mubr.f32.mxu0 0.0
  %965 = vmatmul.mubr.f32.gmra.mxu0 %v888
  %v966 = vpop.f32.mrf.mxu0
  %v967 = vadd.f32 0.0, %v966
  %v968 = vpop.f32.mrf.mxu0
  %v969 = vadd.f32 0.0, %v968
  %970 = vmatprep.mubr.f32.mxu0 0.0
  %971 = vmatmul.mubr.f32.gmra.mxu0 %v890
  %v972 = vpop.f32.mrf.mxu0
  %v973 = vadd.f32 0.0, %v972
  %v974 = vpop.f32.mrf.mxu0
  %v975 = vadd.f32 0.0, %v974
  %976 = vmatprep.mubr.f32.mxu0 0.0
  %977 = vmatmul.mubr.f32.gmra.mxu0 %v892
  %v978 = vpop.f32.mrf.mxu0
  %v979 = vadd.f32 0.0, %v978
  %v980 = vpop.f32.mrf.mxu0
  %v981 = vadd.f32 0.0, %v980
  %982 = vdwg.mxu0
  %v983 = vadd.f32 %v754, %v961
  %v984 = vadd.f32 %v755, %v963
  %v985 = vadd.f32 %v756, %v967
  %v986 = vadd.f32 %v757, %v969
  %v987 = vadd.f32 %v758, %v973
  %v988 = vadd.f32 %v759, %v975
  %v989 = vadd.f32 %v760, %v979
  %v990 = vadd.f32 %v761, %v981
  %v991 = vld [vmem:[%s2] sm:$0x3]
  %v993 = vlaneseq
  %v994 = vshrl.u32 %v993, 7
  %v995 = vsub.s32 0, %v994
  %v996 = vrot.slane %v991, %v995
  %v997 = vlaneseq
  %v998 = vshrl.u32 %v997, 7
  %v999 = vsub.s32 1, %v998
  %v1000 = vrot.slane %v991, %v999
  %v1003 = vadd.f32 %v983, %v996
  %v1004 = vadd.f32 %v984, %v1000
  %v1005 = vadd.f32 %v985, %v996
  %v1006 = vadd.f32 %v986, %v1000
  %v1007 = vadd.f32 %v987, %v996
  %v1008 = vadd.f32 %v988, %v1000
  %v1009 = vadd.f32 %v989, %v996
  %v1010 = vadd.f32 %v990, %v1000
  %v1011 = vtanh.pop %v1003
  %v1012 = vtanh.pop %v1005
  %v1013 = vtanh.pop %v1007
  %v1014 = vtanh.pop %v1009
  %v1015 = vxor.u32 %v1004, 2147483648
  %v1016 = vxor.u32 %v1006, 2147483648
  %v1017 = vxor.u32 %v1008, 2147483648
  %v1018 = vxor.u32 %v1010, 2147483648
  %v1019 = vmul.f32 %v1015, 1.442695
  %v1020 = vpow.pop %v1019
  %v1021 = vmul.f32 %v1016, 1.442695
  %v1022 = vpow.pop %v1021
  %v1023 = vmul.f32 %v1017, 1.442695
  %v1024 = vpow.pop %v1023
  %v1025 = vmul.f32 %v1018, 1.442695
  %v1026 = vpow.pop %v1025
  %v1027 = vadd.f32 %v1020, 1.0
  %v1028 = vadd.f32 %v1022, 1.0
  %v1029 = vadd.f32 %v1024, 1.0
  %v1030 = vadd.f32 %v1026, 1.0
  %v1031 = vrcp.pop %v1027
  %v1032 = vmul.f32 1.0, %v1031
  %v1033 = vrcp.pop %v1028
  %v1034 = vmul.f32 1.0, %v1033
  %v1035 = vrcp.pop %v1029
  %v1036 = vmul.f32 1.0, %v1035
  %v1037 = vrcp.pop %v1030
  %v1038 = vmul.f32 1.0, %v1037
  %v1039 = vmul.f32 %v1011, %v1032
  %v1040 = vmul.f32 %v1012, %v1034
  %v1041 = vmul.f32 %v1013, %v1036
  %v1042 = vmul.f32 %v1014, %v1038
  %1043 = vst [vmem:[%s3] sm:$0xff] %v1039
  %1044 = vst [vmem:[%s3 + $0x8] sm:$0xff] %v1040
  %1045 = vst [vmem:[%s3 + $0x10] sm:$0xff] %v1041
  %1046 = vst [vmem:[%s3 + $0x18] sm:$0xff] %v1042
  // Predicated region
  $region14: #{gated_temporal_conv.1} parent=0 // pred_check
    _
  $region15: #{gated_temporal_conv.1} parent=0 // pred_check_branch
    %1048 = sbr.rel (0) target = $region17
  $region16: #{gated_temporal_conv.1} parent=0 // pred_region
    _
  $region17: #{gated_temporal_conv.1} parent=0 // pred_fallthru
    _
  // Predicated region
  $region18: #{gated_temporal_conv.1} parent=0 // pred_check
    _
  $region19: #{gated_temporal_conv.1} parent=0 // pred_check_branch
    %1050 = sbr.rel (0) target = $region21
  $region20: #{gated_temporal_conv.1} parent=0 // pred_region
    _
  $region21: #{gated_temporal_conv.1} parent=0 // pred_fallthru
    _

</llo_original>
